<compile_context>
chip_gen: v7x
topology: tpu7x:2x2x1
jax: 0.10.0
libtpu: 0.0.40
codegen_flags: <defaults>
</compile_context>

<pallas_src>
import jax
import jax.numpy as jnp
from jax.experimental import pallas as pl
from jax.experimental.pallas import tpu as pltpu


def _make_kernel(num_hidden, d_in):
    """Build a kernel for a fixed (static) number of hidden layers and input width.

    All arrays are feature-major: activations are (features, tb) with the batch in lanes.
    """

    def kernel(x_ref, beta_ref, *refs):
        # refs = (w0, b0, w1, b1, ..., w_last, b_last, out_ref)
        o_ref = refs[-1]
        param_refs = refs[:-1]
        w_refs = param_refs[0::2]     # each W_i: (out_features, in_features)  (torch layout)
        b_refs = param_refs[1::2]     # each b_i: (out_features, 1)

        a = x_ref[...]                                   # (d_in, tb) -- lane-dense batch

        # hidden layers: z = W @ a + b ; a = tanh(z) + beta[:, i] * z * tanh(z)
        for i in range(num_hidden):
            w = w_refs[i][...]
            b = b_refs[i][...]
            if i == 0 and d_in == 1:
                # K == 1 contraction: broadcast multiply on the VPU, skip the MXU entirely.
                z = w * a + b                            # (H,1)*(1,tb) -> (H,tb)
            else:
                z = jnp.dot(w, a, preferred_element_type=jnp.float32) + b
            t = jnp.tanh(z)
            beta_i = beta_ref[:, i:i + 1]                # (hidden, 1) -> broadcast over lanes
            a = t + beta_i * z * t

        # final linear layer (no activation); MXU streams the lane-dense N=tb dimension.
        out = jnp.dot(w_refs[num_hidden][...], a,
                      preferred_element_type=jnp.float32) + b_refs[num_hidden][...]
        o_ref[...] = out.astype(o_ref.dtype)             # (d_out, tb), lane-dense store

    return kernel


def _full_spec(arr):
    """Whole array resident in VMEM; constant index_map so it is not re-fetched per grid step."""
    nd = arr.ndim
    return pl.BlockSpec(arr.shape, lambda i: (0,) * nd)


def _choose_tb(N, tb_max=2048):
    """Batch tile (lane dimension): a multiple of 128, single grid step up to tb_max.

    v5e/v6e are single-TC, so splitting a small batch into multiple grid steps only adds
    per-step overhead; large batches tile at tb_max and the grid steps can be sharded
    across v7x's two TensorCores.
    """
    n128 = ((N + 127) // 128) * 128
    return min(tb_max, n128)


def sequential_model_forward(x, lb, ub, beta, weights, biases, *, tb=None):
    """Pallas forward pass.

    Args:
      x:       (N, d_in) float32.
      lb, ub:  (1, d_in) domain bounds.
      beta:    (hidden, num_hidden)  -- the torch Parameter layout.
      weights: list of (out_features, in_features) arrays (torch nn.Linear layout).
      biases:  list of (out_features,) arrays.
    Returns:
      (N, d_out) float32.
    """
    N, d_in = x.shape
    num_hidden = len(weights) - 1
    hidden = weights[0].shape[0]
    d_out = weights[-1].shape[0]
    assert beta.shape == (hidden, num_hidden), "beta must be (hidden_width, num_hidden)"

    # Fold the affine normalization  x_norm = x*scale + offset  into layer 0:
    #   W0' = W0 * scale  (per input-feature column scale),  b0' = b0 + W0 @ offset^T
    scale = (2.0 / (ub - lb)).astype(jnp.float32)                 # (1, d_in)
    offset = (-2.0 * lb / (ub - lb) - 1.0).astype(jnp.float32)    # (1, d_in)
    w0 = weights[0].astype(jnp.float32)
    b0 = biases[0].reshape(-1, 1).astype(jnp.float32)
    ws = [w0 * scale] + [w.astype(jnp.float32) for w in weights[1:]]
    bs = [b0 + w0 @ offset.T] + [b.reshape(-1, 1).astype(jnp.float32) for b in biases[1:]]

    if tb is None:
        tb = _choose_tb(N)
    assert tb % 128 == 0, "batch tile must be lane-aligned (multiple of 128)"
    grid = pl.cdiv(N, tb)
    n_pad = grid * tb

    # Feature-major, lane-dense input: (d_in, n_pad) with the batch in lanes.
    xt = x.T.astype(jnp.float32)
    if n_pad != N:
        xt = jnp.pad(xt, ((0, 0), (0, n_pad - N)))

    beta = beta.astype(jnp.float32)

    in_specs = [
        pl.BlockSpec((d_in, tb), lambda i: (0, i)),   # x tile (batch in lanes)
        _full_spec(beta),
    ]
    flat_params = []
    for w, b in zip(ws, bs):
        in_specs.append(_full_spec(w))
        in_specs.append(_full_spec(b))
        flat_params.append(w)
        flat_params.append(b)

    kernel = _make_kernel(num_hidden, d_in)

    out_t = pl.pallas_call(
        kernel,
        out_shape=jax.ShapeDtypeStruct((d_out, n_pad), jnp.float32),
        grid=(grid,),
        in_specs=in_specs,
        out_specs=pl.BlockSpec((d_out, tb), lambda i: (0, i)),   # lane-dense output store
        compiler_params=pltpu.CompilerParams(
            dimension_semantics=("parallel",),
            vmem_limit_bytes=32 * 1024 * 1024),
    )(xt, beta, *flat_params)

    return out_t[:, :N].T                                       # back to (N, d_out)


def reference_forward(x, lb, ub, beta, weights, biases):
    """Pure-JAX reference mirroring the PyTorch module (row-major, torch-layout weights)."""
    a = 2.0 * (x - lb) / (ub - lb) - 1.0
    num_hidden = len(weights) - 1
    for i in range(num_hidden):
        z = a @ weights[i].T + biases[i]
        t = jnp.tanh(z)
        a = t + beta[:, i] * z * t
    return a @ weights[-1].T + biases[-1]


if __name__ == "__main__":
    # layers = [d_in, 50, 50, 50, d_out] -- hidden width 50 (required by the beta Parameter)
    layers = [1, 50, 50, 50, 2]
    num_linear = len(layers) - 1
    num_hidden = len(layers) - 2
    hidden = 50

    key = jax.random.PRNGKey(0)

    # Deterministic parameter init:
    #   weights ~ xavier_normal (gain=1): std = sqrt(2 / (fan_in + fan_out)); biases = 0.
    #   Stored in the natural PyTorch layout (out_features, in_features).
    weights, biases = [], []
    for i in range(num_linear):
        key, wkey = jax.random.split(key)
        fan_in, fan_out = layers[i], layers[i + 1]
        std = (2.0 / (fan_in + fan_out)) ** 0.5
        w = std * jax.random.normal(wkey, (fan_out, fan_in), dtype=jnp.float32)
        b = jnp.zeros((fan_out,), dtype=jnp.float32)
        weights.append(w)
        biases.append(b)

    # beta initialised to ones, torch Parameter shape (50, num_hidden).
    beta = jnp.ones((hidden, num_hidden), dtype=jnp.float32)

    # Van der Pol domain bounds (lb/ub come from the notebook namespace in the original code).
    lb = jnp.array([[0.0]], dtype=jnp.float32)    # (1, d_in)
    ub = jnp.array([[10.0]], dtype=jnp.float32)   # (1, d_in)

    # Case 1: small batch -> one 128-wide lane tile, single grid step.
    N1 = 32
    key, xkey = jax.random.split(key)
    x1 = 10.0 * jax.random.uniform(xkey, (N1, layers[0]), dtype=jnp.float32)
    out1 = jax.block_until_ready(
        sequential_model_forward(x1, lb, ub, beta, weights, biases))
    ref1 = reference_forward(x1, lb, ub, beta, weights, biases)
    assert out1.shape == (N1, layers[-1])
    assert jnp.allclose(out1, ref1, atol=1e-4, rtol=1e-4), "mismatch vs reference (case 1)"

    # Case 2: batch not a multiple of 128 -> pad + slice tail handling, still one grid step.
    N2 = 300
    key, xkey = jax.random.split(key)
    x2 = 10.0 * jax.random.uniform(xkey, (N2, layers[0]), dtype=jnp.float32)
    out2 = jax.block_until_ready(
        sequential_model_forward(x2, lb, ub, beta, weights, biases))
    ref2 = reference_forward(x2, lb, ub, beta, weights, biases)
    assert out2.shape == (N2, layers[-1])
    assert jnp.allclose(out2, ref2, atol=1e-4, rtol=1e-4), "mismatch vs reference (case 2)"

    # Case 3: force a small tile (tb=128) so the batch spans multiple grid steps.
    out3 = jax.block_until_ready(
        sequential_model_forward(x2, lb, ub, beta, weights, biases, tb=128))
    assert out3.shape == (N2, layers[-1])
    assert jnp.allclose(out3, ref2, atol=1e-4, rtol=1e-4), "mismatch vs reference (case 3)"

    print("KERNEL_OK")
</pallas_src>

<mosaic_0001>
module attributes {stable_mosaic.version = 11 : i64} {
  func.func @kernel(%arg0: i32, %arg1: memref<1x128xf32, #tpu.memory_space<vmem>>, %arg2: memref<50x3xf32, #tpu.memory_space<vmem>>, %arg3: memref<50x1xf32, #tpu.memory_space<vmem>>, %arg4: memref<50x1xf32, #tpu.memory_space<vmem>>, %arg5: memref<50x50xf32, #tpu.memory_space<vmem>>, %arg6: memref<50x1xf32, #tpu.memory_space<vmem>>, %arg7: memref<50x50xf32, #tpu.memory_space<vmem>>, %arg8: memref<50x1xf32, #tpu.memory_space<vmem>>, %arg9: memref<2x50xf32, #tpu.memory_space<vmem>>, %arg10: memref<2x1xf32, #tpu.memory_space<vmem>>, %arg11: memref<2x128xf32, #tpu.memory_space<vmem>>) attributes {dimension_semantics = [#tpu.dimension_semantics<parallel>], iteration_bounds = array<i64: 1>, scalar_prefetch = 0 : i64, scratch_operands = 0 : i64, tpu.core_type = #tpu.core_type<tc>, window_params = [{transform_indices = @transform_0, window_bounds = array<i64: 1, 128>}, {pipeline_mode = #tpu.pipeline_mode<synchronous>, transform_indices = @transform_1, window_bounds = array<i64: 50, 3>}, {pipeline_mode = #tpu.pipeline_mode<synchronous>, transform_indices = @transform_2, window_bounds = array<i64: 50, 1>}, {pipeline_mode = #tpu.pipeline_mode<synchronous>, transform_indices = @transform_3, window_bounds = array<i64: 50, 1>}, {pipeline_mode = #tpu.pipeline_mode<synchronous>, transform_indices = @transform_4, window_bounds = array<i64: 50, 50>}, {pipeline_mode = #tpu.pipeline_mode<synchronous>, transform_indices = @transform_5, window_bounds = array<i64: 50, 1>}, {pipeline_mode = #tpu.pipeline_mode<synchronous>, transform_indices = @transform_6, window_bounds = array<i64: 50, 50>}, {pipeline_mode = #tpu.pipeline_mode<synchronous>, transform_indices = @transform_7, window_bounds = array<i64: 50, 1>}, {pipeline_mode = #tpu.pipeline_mode<synchronous>, transform_indices = @transform_8, window_bounds = array<i64: 2, 50>}, {pipeline_mode = #tpu.pipeline_mode<synchronous>, transform_indices = @transform_9, window_bounds = array<i64: 2, 1>}, {transform_indices = @transform_10, window_bounds = array<i64: 2, 128>}]} {
    %c0 = arith.constant 0 : index
    %c0_0 = arith.constant 0 : index
    %0 = vector.load %arg1[%c0, %c0_0] : memref<1x128xf32, #tpu.memory_space<vmem>>, vector<1x128xf32>
    %c0_1 = arith.constant 0 : index
    %c0_2 = arith.constant 0 : index
    %1 = vector.load %arg3[%c0_1, %c0_2] : memref<50x1xf32, #tpu.memory_space<vmem>>, vector<50x1xf32>
    %c0_3 = arith.constant 0 : index
    %c0_4 = arith.constant 0 : index
    %2 = vector.load %arg4[%c0_3, %c0_4] : memref<50x1xf32, #tpu.memory_space<vmem>>, vector<50x1xf32>
    %3 = vector.broadcast %1 : vector<50x1xf32> to vector<50x128xf32>
    %4 = vector.broadcast %0 : vector<1x128xf32> to vector<50x128xf32>
    %5 = arith.mulf %3, %4 : vector<50x128xf32>
    %6 = vector.broadcast %2 : vector<50x1xf32> to vector<50x128xf32>
    %7 = arith.addf %5, %6 : vector<50x128xf32>
    %8 = math.tanh %7 : vector<50x128xf32>
    %c0_5 = arith.constant 0 : index
    %c0_6 = arith.constant 0 : index
    %9 = vector.load %arg2[%c0_5, %c0_6] : memref<50x3xf32, #tpu.memory_space<vmem>>, vector<50x1xf32>
    %10 = vector.broadcast %9 : vector<50x1xf32> to vector<50x128xf32>
    %11 = arith.mulf %10, %7 : vector<50x128xf32>
    %12 = arith.mulf %11, %8 : vector<50x128xf32>
    %13 = arith.addf %8, %12 : vector<50x128xf32>
    %c0_7 = arith.constant 0 : index
    %c0_8 = arith.constant 0 : index
    %14 = vector.load %arg5[%c0_7, %c0_8] : memref<50x50xf32, #tpu.memory_space<vmem>>, vector<50x50xf32>
    %c0_9 = arith.constant 0 : index
    %c0_10 = arith.constant 0 : index
    %15 = vector.load %arg6[%c0_9, %c0_10] : memref<50x1xf32, #tpu.memory_space<vmem>>, vector<50x1xf32>
    %cst = arith.constant dense<0.000000e+00> : vector<50x128xf32>
    %16 = tpu.matmul %14, %13, %cst {dimension_numbers = #tpu.dot_dimension_numbers<[1], [0], [0], [1], [0, 0, 1, 1], [], []>} : vector<50x50xf32>, vector<50x128xf32>, vector<50x128xf32> -> vector<50x128xf32>
    %17 = vector.broadcast %15 : vector<50x1xf32> to vector<50x128xf32>
    %18 = arith.addf %16, %17 : vector<50x128xf32>
    %19 = math.tanh %18 : vector<50x128xf32>
    %c0_11 = arith.constant 0 : index
    %c1 = arith.constant 1 : index
    %20 = vector.load %arg2[%c0_11, %c1] : memref<50x3xf32, #tpu.memory_space<vmem>>, vector<50x1xf32>
    %21 = vector.broadcast %20 : vector<50x1xf32> to vector<50x128xf32>
    %22 = arith.mulf %21, %18 : vector<50x128xf32>
    %23 = arith.mulf %22, %19 : vector<50x128xf32>
    %24 = arith.addf %19, %23 : vector<50x128xf32>
    %c0_12 = arith.constant 0 : index
    %c0_13 = arith.constant 0 : index
    %25 = vector.load %arg7[%c0_12, %c0_13] : memref<50x50xf32, #tpu.memory_space<vmem>>, vector<50x50xf32>
    %c0_14 = arith.constant 0 : index
    %c0_15 = arith.constant 0 : index
    %26 = vector.load %arg8[%c0_14, %c0_15] : memref<50x1xf32, #tpu.memory_space<vmem>>, vector<50x1xf32>
    %cst_16 = arith.constant dense<0.000000e+00> : vector<50x128xf32>
    %27 = tpu.matmul %25, %24, %cst_16 {dimension_numbers = #tpu.dot_dimension_numbers<[1], [0], [0], [1], [0, 0, 1, 1], [], []>} : vector<50x50xf32>, vector<50x128xf32>, vector<50x128xf32> -> vector<50x128xf32>
    %28 = vector.broadcast %26 : vector<50x1xf32> to vector<50x128xf32>
    %29 = arith.addf %27, %28 : vector<50x128xf32>
    %30 = math.tanh %29 : vector<50x128xf32>
    %c0_17 = arith.constant 0 : index
    %c2 = arith.constant 2 : index
    %31 = vector.load %arg2[%c0_17, %c2] : memref<50x3xf32, #tpu.memory_space<vmem>>, vector<50x1xf32>
    %32 = vector.broadcast %31 : vector<50x1xf32> to vector<50x128xf32>
    %33 = arith.mulf %32, %29 : vector<50x128xf32>
    %34 = arith.mulf %33, %30 : vector<50x128xf32>
    %35 = arith.addf %30, %34 : vector<50x128xf32>
    %c0_18 = arith.constant 0 : index
    %c0_19 = arith.constant 0 : index
    %36 = vector.load %arg9[%c0_18, %c0_19] : memref<2x50xf32, #tpu.memory_space<vmem>>, vector<2x50xf32>
    %cst_20 = arith.constant dense<0.000000e+00> : vector<2x128xf32>
    %37 = tpu.matmul %36, %35, %cst_20 {dimension_numbers = #tpu.dot_dimension_numbers<[1], [0], [0], [1], [0, 0, 1, 1], [], []>} : vector<2x50xf32>, vector<50x128xf32>, vector<2x128xf32> -> vector<2x128xf32>
    %c0_21 = arith.constant 0 : index
    %c0_22 = arith.constant 0 : index
    %38 = vector.load %arg10[%c0_21, %c0_22] : memref<2x1xf32, #tpu.memory_space<vmem>>, vector<2x1xf32>
    %39 = vector.broadcast %38 : vector<2x1xf32> to vector<2x128xf32>
    %40 = arith.addf %37, %39 : vector<2x128xf32>
    %c0_23 = arith.constant 0 : index
    %c0_24 = arith.constant 0 : index
    %41 = vector.load %arg11[%c0_23, %c0_24] : memref<2x128xf32, #tpu.memory_space<vmem>>, vector<2x128xf32>
    tpu.vector_store %arg11[%c0_23, %c0_24], %40 {strides = array<i32>} : memref<2x128xf32, #tpu.memory_space<vmem>>, vector<2x128xf32>,
    return
  }
  func.func @transform_0(%arg0: i32) -> (i32, i32) {
    %c0_i32 = arith.constant 0 : i32
    %c0_i32_0 = arith.constant 0 : i32
    return %c0_i32, %arg0 : i32, i32
  }
  func.func @transform_1(%arg0: i32) -> (i32, i32) {
    %c0_i32 = arith.constant 0 : i32
    %c0_i32_0 = arith.constant 0 : i32
    %c0_i32_1 = arith.constant 0 : i32
    return %c0_i32, %c0_i32_0 : i32, i32
  }
  func.func @transform_2(%arg0: i32) -> (i32, i32) {
    %c0_i32 = arith.constant 0 : i32
    %c0_i32_0 = arith.constant 0 : i32
    %c0_i32_1 = arith.constant 0 : i32
    return %c0_i32, %c0_i32_0 : i32, i32
  }
  func.func @transform_3(%arg0: i32) -> (i32, i32) {
    %c0_i32 = arith.constant 0 : i32
    %c0_i32_0 = arith.constant 0 : i32
    %c0_i32_1 = arith.constant 0 : i32
    return %c0_i32, %c0_i32_0 : i32, i32
  }
  func.func @transform_4(%arg0: i32) -> (i32, i32) {
    %c0_i32 = arith.constant 0 : i32
    %c0_i32_0 = arith.constant 0 : i32
    %c0_i32_1 = arith.constant 0 : i32
    return %c0_i32, %c0_i32_0 : i32, i32
  }
  func.func @transform_5(%arg0: i32) -> (i32, i32) {
    %c0_i32 = arith.constant 0 : i32
    %c0_i32_0 = arith.constant 0 : i32
    %c0_i32_1 = arith.constant 0 : i32
    return %c0_i32, %c0_i32_0 : i32, i32
  }
  func.func @transform_6(%arg0: i32) -> (i32, i32) {
    %c0_i32 = arith.constant 0 : i32
    %c0_i32_0 = arith.constant 0 : i32
    %c0_i32_1 = arith.constant 0 : i32
    return %c0_i32, %c0_i32_0 : i32, i32
  }
  func.func @transform_7(%arg0: i32) -> (i32, i32) {
    %c0_i32 = arith.constant 0 : i32
    %c0_i32_0 = arith.constant 0 : i32
    %c0_i32_1 = arith.constant 0 : i32
    return %c0_i32, %c0_i32_0 : i32, i32
  }
  func.func @transform_8(%arg0: i32) -> (i32, i32) {
    %c0_i32 = arith.constant 0 : i32
    %c0_i32_0 = arith.constant 0 : i32
    %c0_i32_1 = arith.constant 0 : i32
    return %c0_i32, %c0_i32_0 : i32, i32
  }
  func.func @transform_9(%arg0: i32) -> (i32, i32) {
    %c0_i32 = arith.constant 0 : i32
    %c0_i32_0 = arith.constant 0 : i32
    %c0_i32_1 = arith.constant 0 : i32
    return %c0_i32, %c0_i32_0 : i32, i32
  }
  func.func @transform_10(%arg0: i32) -> (i32, i32) {
    %c0_i32 = arith.constant 0 : i32
    %c0_i32_0 = arith.constant 0 : i32
    return %c0_i32, %arg0 : i32, i32
  }
}

</mosaic_0001>

<llo_original>
// kernel: tpu_custom_call.1
$region0: #{tpu_custom_call.1}
  #allocation0 [shape = 'u32[]', space=smem, size = 0x4, offset = 0x4, fixed_abs, tag = 'smem constant byte address 0x4 - core index']
  #allocation1 [shape = 'u32[144,128]{1,0:T(1,128)}', space=vmem, size = 0x12000, scoped, tag = 'internal scratch']
  %s0 = inlined_call_operand.vmem [shape: f32[1,128], index: 0, kind: input, shape index: {}]
  %s1 = inlined_call_operand.vmem [shape: f32[50,3], index: 1, kind: input, shape index: {}]
  %s2 = inlined_call_operand.vmem [shape: f32[50,1], index: 2, kind: input, shape index: {}]
  %s3 = inlined_call_operand.vmem [shape: f32[50,1], index: 3, kind: input, shape index: {}]
  %s4 = inlined_call_operand.vmem [shape: f32[50,50], index: 4, kind: input, shape index: {}]
  %s5 = inlined_call_operand.vmem [shape: f32[50,1], index: 5, kind: input, shape index: {}]
  %s6 = inlined_call_operand.vmem [shape: f32[50,50], index: 6, kind: input, shape index: {}]
  %s7 = inlined_call_operand.vmem [shape: f32[50,1], index: 7, kind: input, shape index: {}]
  %s8 = inlined_call_operand.vmem [shape: f32[2,50], index: 8, kind: input, shape index: {}]
  %s9 = inlined_call_operand.vmem [shape: f32[2,1], index: 9, kind: input, shape index: {}]
  %s10 = inlined_call_operand.hbm [shape: f32[2,128], index: 10, kind: output, shape index: {}]
  %s11 = sld [smem:[#allocation0]]
  $region50: #{tpu_custom_call.1} parent=0
    _
  %s13 = ssub.s32 1, %s11
  %s14 = scalar_select 0, %s13, %s11
  $region1: #{tpu_custom_call.1} parent=0
    #allocation2 [shape = 'u8[1024]{0}', space=vmem, size = 0x400, scoped, tag = 'output window, operand 0, single buffered']
    #allocation3 [shape = 's32[1]{0}', space=sflag, size = 0x4, scoped, tag = 'scoped memory for tpu_custom_call.1']
    %15 = vsyncpa [#allocation3], 0
    // Predicated region
    $region2: #{tpu_custom_call.1} parent=1 // pred_check
      _
    $region3: #{tpu_custom_call.1} parent=1 // pred_check_branch
      %17 = sbr.rel (0) target = $region5
    $region4: #{tpu_custom_call.1} parent=1 // pred_region
      _
    $region5: #{tpu_custom_call.1} parent=1 // pred_fallthru
      _
    // Predicated region
    $region6: #{tpu_custom_call.1} parent=1 // pred_check
      _
    $region7: #{tpu_custom_call.1} parent=1 // pred_check_branch
      %19 = sbr.rel (0) target = $region9
    $region8: #{tpu_custom_call.1} parent=1 // pred_region
      _
    $region9: #{tpu_custom_call.1} parent=1 // pred_fallthru
      _
    // Predicated region
    $region10: #{tpu_custom_call.1} parent=1 // pred_check
      _
    $region11: #{tpu_custom_call.1} parent=1 // pred_check_branch
      %21 = sbr.rel (0) target = $region13
    $region12: #{tpu_custom_call.1} parent=1 // pred_region
      _
    $region13: #{tpu_custom_call.1} parent=1 // pred_fallthru
      _
    // Predicated region
    $region14: #{tpu_custom_call.1} parent=1 // pred_check
      _
    $region15: #{tpu_custom_call.1} parent=1 // pred_check_branch
      %23 = sbr.rel (0) target = $region17
    $region16: #{tpu_custom_call.1} parent=1 // pred_region
      _
    $region17: #{tpu_custom_call.1} parent=1 // pred_fallthru
      _
    // Predicated region
    $region18: #{tpu_custom_call.1} parent=1 // pred_check
      _
    $region19: #{tpu_custom_call.1} parent=1 // pred_check_branch
      %25 = sbr.rel (0) target = $region21
    $region20: #{tpu_custom_call.1} parent=1 // pred_region
      _
    $region21: #{tpu_custom_call.1} parent=1 // pred_fallthru
      _
    // Predicated region
    $region22: #{tpu_custom_call.1} parent=1 // pred_check
      _
    $region23: #{tpu_custom_call.1} parent=1 // pred_check_branch
      %27 = sbr.rel (0) target = $region25
    $region24: #{tpu_custom_call.1} parent=1 // pred_region
      _
    $region25: #{tpu_custom_call.1} parent=1 // pred_fallthru
      _
    // Predicated region
    $region26: #{tpu_custom_call.1} parent=1 // pred_check
      _
    $region27: #{tpu_custom_call.1} parent=1 // pred_check_branch
      %29 = sbr.rel (0) target = $region29
    $region28: #{tpu_custom_call.1} parent=1 // pred_region
      _
    $region29: #{tpu_custom_call.1} parent=1 // pred_fallthru
      _
    // Predicated region
    $region30: #{tpu_custom_call.1} parent=1 // pred_check
      _
    $region31: #{tpu_custom_call.1} parent=1 // pred_check_branch
      %31 = sbr.rel (0) target = $region33
    $region32: #{tpu_custom_call.1} parent=1 // pred_region
      _
    $region33: #{tpu_custom_call.1} parent=1 // pred_fallthru
      _
    // Predicated region
    $region34: #{tpu_custom_call.1} parent=1 // pred_check
      _
    $region35: #{tpu_custom_call.1} parent=1 // pred_check_branch
      %33 = sbr.rel (0) target = $region37
    $region36: #{tpu_custom_call.1} parent=1 // pred_region
      _
    $region37: #{tpu_custom_call.1} parent=1 // pred_fallthru
      _
    // Predicated region
    $region38: #{tpu_custom_call.1} parent=1 // pred_check
      _
    $region39: #{tpu_custom_call.1} parent=1 // pred_check_branch
      %35 = sbr.rel (0) target = $region41
    $region40: #{tpu_custom_call.1} parent=1 // pred_region
      _
    $region41: #{tpu_custom_call.1} parent=1 // pred_fallthru
      _
    %v36 = vld [vmem:[%s0] sm:$0x1]
    %v37 = vld [vmem:[%s2] sm:$0xff]
    %v38 = vld [vmem:[%s2 + $0x8] sm:$0xff]
    %v39 = vld [vmem:[%s2 + $0x10] sm:$0xff]
    %v40 = vld [vmem:[%s2 + $0x18] sm:$0xff]
    %v41 = vld [vmem:[%s2 + $0x20] sm:$0xff]
    %v42 = vld [vmem:[%s2 + $0x28] sm:$0xff]
    %v43 = vld [vmem:[%s2 + $0x30] sm:$0x3]
    %v44 = vld [vmem:[%s3] sm:$0xff]
    %v45 = vld [vmem:[%s3 + $0x8] sm:$0xff]
    %v46 = vld [vmem:[%s3 + $0x10] sm:$0xff]
    %v47 = vld [vmem:[%s3 + $0x18] sm:$0xff]
    %v48 = vld [vmem:[%s3 + $0x20] sm:$0xff]
    %v49 = vld [vmem:[%s3 + $0x28] sm:$0xff]
    %v50 = vld [vmem:[%s3 + $0x30] sm:$0x3]
    %52 = vset.pattern.permute.xlu0 0
    %53 = vperm.xlu0 %52, %v37
    %v54 = vpop.permute.xlu0 %53
    %57 = vset.pattern.permute.xlu0 0
    %58 = vperm.xlu0 %57, %v38
    %v59 = vpop.permute.xlu0 %58
    %62 = vset.pattern.permute.xlu0 0
    %63 = vperm.xlu0 %62, %v39
    %v64 = vpop.permute.xlu0 %63
    %67 = vset.pattern.permute.xlu0 0
    %68 = vperm.xlu0 %67, %v40
    %v69 = vpop.permute.xlu0 %68
    %72 = vset.pattern.permute.xlu0 0
    %73 = vperm.xlu0 %72, %v41
    %v74 = vpop.permute.xlu0 %73
    %77 = vset.pattern.permute.xlu0 0
    %78 = vperm.xlu0 %77, %v42
    %v79 = vpop.permute.xlu0 %78
    %82 = vset.pattern.permute.xlu0 0
    %83 = vperm.xlu0 %82, %v43
    %v84 = vpop.permute.xlu0 %83
    %v87 = vlaneseq
    %v88 = vshrl.u32 %v87, 7
    %v89 = vsub.s32 0, %v88
    %v90 = vrot.slane %v36, %v89
    %v92 = vmul.f32 %v54, %v90
    %v93 = vmul.f32 %v59, %v90
    %v94 = vmul.f32 %v64, %v90
    %v95 = vmul.f32 %v69, %v90
    %v96 = vmul.f32 %v74, %v90
    %v97 = vmul.f32 %v79, %v90
    %v98 = vmul.f32 %v84, %v90
    %100 = vset.pattern.permute.xlu0 0
    %101 = vperm.xlu0 %100, %v44
    %v102 = vpop.permute.xlu0 %101
    %105 = vset.pattern.permute.xlu0 0
    %106 = vperm.xlu0 %105, %v45
    %v107 = vpop.permute.xlu0 %106
    %110 = vset.pattern.permute.xlu0 0
    %111 = vperm.xlu0 %110, %v46
    %v112 = vpop.permute.xlu0 %111
    %115 = vset.pattern.permute.xlu0 0
    %116 = vperm.xlu0 %115, %v47
    %v117 = vpop.permute.xlu0 %116
    %120 = vset.pattern.permute.xlu0 0
    %121 = vperm.xlu0 %120, %v48
    %v122 = vpop.permute.xlu0 %121
    %125 = vset.pattern.permute.xlu0 0
    %126 = vperm.xlu0 %125, %v49
    %v127 = vpop.permute.xlu0 %126
    %130 = vset.pattern.permute.xlu0 0
    %131 = vperm.xlu0 %130, %v50
    %v132 = vpop.permute.xlu0 %131
    %v134 = vadd.f32 %v92, %v102
    %v135 = vadd.f32 %v93, %v107
    %v136 = vadd.f32 %v94, %v112
    %v137 = vadd.f32 %v95, %v117
    %v138 = vadd.f32 %v96, %v122
    %v139 = vadd.f32 %v97, %v127
    %v140 = vadd.f32 %v98, %v132
    %v141 = vtanh.pop %v134
    %v142 = vtanh.pop %v135
    %v143 = vtanh.pop %v136
    %v144 = vtanh.pop %v137
    %v145 = vtanh.pop %v138
    %v146 = vtanh.pop %v139
    %v147 = vtanh.pop %v140
    %v148 = vld [vmem:[%s1] sm:$0xff]
    %v149 = vld [vmem:[%s1 + $0x8] sm:$0xff]
    %v150 = vld [vmem:[%s1 + $0x10] sm:$0xff]
    %v151 = vld [vmem:[%s1 + $0x18] sm:$0xff]
    %v152 = vld [vmem:[%s1 + $0x20] sm:$0xff]
    %v153 = vld [vmem:[%s1 + $0x28] sm:$0xff]
    %v154 = vld [vmem:[%s1 + $0x30] sm:$0x3]
    %156 = vset.pattern.permute.xlu0 0
    %157 = vperm.xlu0 %156, %v148
    %v158 = vpop.permute.xlu0 %157
    %161 = vset.pattern.permute.xlu0 0
    %162 = vperm.xlu0 %161, %v149
    %v163 = vpop.permute.xlu0 %162
    %166 = vset.pattern.permute.xlu0 0
    %167 = vperm.xlu0 %166, %v150
    %v168 = vpop.permute.xlu0 %167
    %171 = vset.pattern.permute.xlu0 0
    %172 = vperm.xlu0 %171, %v151
    %v173 = vpop.permute.xlu0 %172
    %176 = vset.pattern.permute.xlu0 0
    %177 = vperm.xlu0 %176, %v152
    %v178 = vpop.permute.xlu0 %177
    %181 = vset.pattern.permute.xlu0 0
    %182 = vperm.xlu0 %181, %v153
    %v183 = vpop.permute.xlu0 %182
    %186 = vset.pattern.permute.xlu0 0
    %187 = vperm.xlu0 %186, %v154
    %v188 = vpop.permute.xlu0 %187
    %v190 = vmul.f32 %v158, %v134
    %v191 = vmul.f32 %v163, %v135
    %v192 = vmul.f32 %v168, %v136
    %v193 = vmul.f32 %v173, %v137
    %v194 = vmul.f32 %v178, %v138
    %v195 = vmul.f32 %v183, %v139
    %v196 = vmul.f32 %v188, %v140
    %v197 = vmul.f32 %v190, %v141
    %v198 = vmul.f32 %v191, %v142
    %v199 = vmul.f32 %v192, %v143
    %v200 = vmul.f32 %v193, %v144
    %v201 = vmul.f32 %v194, %v145
    %v202 = vmul.f32 %v195, %v146
    %v203 = vmul.f32 %v196, %v147
    %v204 = vadd.f32 %v141, %v197
    %v205 = vadd.f32 %v142, %v198
    %v206 = vadd.f32 %v143, %v199
    %v207 = vadd.f32 %v144, %v200
    %v208 = vadd.f32 %v145, %v201
    %v209 = vadd.f32 %v146, %v202
    %v210 = vadd.f32 %v147, %v203
    %v211 = vld [vmem:[%s4] sm:$0xff]
    %v212 = vld [vmem:[%s4 + $0x8] sm:$0xff]
    %v213 = vld [vmem:[%s4 + $0x10] sm:$0xff]
    %v214 = vld [vmem:[%s4 + $0x18] sm:$0xff]
    %v215 = vld [vmem:[%s4 + $0x20] sm:$0xff]
    %v216 = vld [vmem:[%s4 + $0x28] sm:$0xff]
    %v217 = vld [vmem:[%s4 + $0x30] sm:$0x3]
    %v218 = vld [vmem:[%s5] sm:$0xff]
    %v219 = vld [vmem:[%s5 + $0x8] sm:$0xff]
    %v220 = vld [vmem:[%s5 + $0x10] sm:$0xff]
    %v221 = vld [vmem:[%s5 + $0x18] sm:$0xff]
    %v222 = vld [vmem:[%s5 + $0x20] sm:$0xff]
    %v223 = vld [vmem:[%s5 + $0x28] sm:$0xff]
    %v224 = vld [vmem:[%s5 + $0x30] sm:$0x3]
    %226 = vset.pattern.permute.xlu0 0
    %227 = vperm.xlu0 %226, %v218
    %v228 = vpop.permute.xlu0 %227
    %231 = vset.pattern.permute.xlu0 0
    %232 = vperm.xlu0 %231, %v219
    %v233 = vpop.permute.xlu0 %232
    %236 = vset.pattern.permute.xlu0 0
    %237 = vperm.xlu0 %236, %v220
    %v238 = vpop.permute.xlu0 %237
    %241 = vset.pattern.permute.xlu0 0
    %242 = vperm.xlu0 %241, %v221
    %v243 = vpop.permute.xlu0 %242
    %246 = vset.pattern.permute.xlu0 0
    %247 = vperm.xlu0 %246, %v222
    %v248 = vpop.permute.xlu0 %247
    %251 = vset.pattern.permute.xlu0 0
    %252 = vperm.xlu0 %251, %v223
    %v253 = vpop.permute.xlu0 %252
    %256 = vset.pattern.permute.xlu0 0
    %257 = vperm.xlu0 %256, %v224
    %v258 = vpop.permute.xlu0 %257
    %vm260 = vcmask 408576
    %v262 = vsel %vm260, %v211, 0
    %v265 = vsel %vm260, %v212, 0
    %v268 = vsel %vm260, %v213, 0
    %v271 = vsel %vm260, %v214, 0
    %v274 = vsel %vm260, %v215, 0
    %v277 = vsel %vm260, %v216, 0
    %v280 = vsel %vm260, %v217, 0
    %vm282 = vcmask 1041408
    %v284 = vsel %vm282, %v210, 0
    %286 = vmatprep.subr.mxu0 0.0
    %287 = vmatpush1.msra.mxu0 %v204
    %288 = vmatprep.subr.mxu0 0.0
    %289 = vmatpush1.msra.mxu0 %v205
    %290 = vmatprep.subr.mxu0 0.0
    %291 = vmatpush1.msra.mxu0 %v206
    %292 = vmatprep.subr.mxu0 0.0
    %293 = vmatpush1.msra.mxu0 %v207
    %294 = vmatprep.subr.mxu0 0.0
    %295 = vmatpush1.msra.mxu0 %v208
    %296 = vmatprep.subr.mxu0 0.0
    %297 = vmatpush1.msra.mxu0 %v209
    %298 = vmatprep.subr.mxu0 0.0
    %299 = vmatpush1.msra.mxu0 %v284
    %300 = vmatprep.subr.mxu0 0.0
    %301 = vmatpush1.msra.mxu0 0.0
    %302 = vmatprep.subr.mxu0 0.0
    %303 = vmatpush1.msra.mxu0 0.0
    %304 = vmatprep.subr.mxu0 0.0
    %305 = vmatpush1.msra.mxu0 0.0
    %306 = vmatprep.subr.mxu0 0.0
    %307 = vmatpush1.msra.mxu0 0.0
    %308 = vmatprep.subr.mxu0 0.0
    %309 = vmatpush1.msra.mxu0 0.0
    %310 = vmatprep.subr.mxu0 0.0
    %311 = vmatpush1.msra.mxu0 0.0
    %312 = vmatprep.subr.mxu0 0.0
    %313 = vmatpush1.msra.mxu0 0.0
    %314 = vmatprep.subr.mxu0 0.0
    %315 = vmatpush1.msra.mxu0 0.0
    %316 = vmatprep.subr.mxu0 0.0
    %317 = vmatpush1.msra.mxu0 0.0
    %318 = vmatprep.subr.mxu0 0.0
    %319 = vmatpush1.msra.mxu0 0.0
    %320 = vmatprep.subr.mxu0 0.0
    %321 = vmatpush1.msra.mxu0 0.0
    %322 = vmatprep.subr.mxu0 0.0
    %323 = vmatpush1.msra.mxu0 0.0
    %324 = vmatprep.subr.mxu0 0.0
    %325 = vmatpush1.msra.mxu0 0.0
    %326 = vmatprep.subr.mxu0 0.0
    %327 = vmatpush1.msra.mxu0 0.0
    %328 = vmatprep.subr.mxu0 0.0
    %329 = vmatpush1.msra.mxu0 0.0
    %330 = vmatprep.subr.mxu0 0.0
    %331 = vmatpush1.msra.mxu0 0.0
    %332 = vmatprep.subr.mxu0 0.0
    %333 = vmatpush1.msra.mxu0 0.0
    %334 = vmatprep.subr.mxu0 0.0
    %335 = vmatpush1.msra.mxu0 0.0
    %336 = vmatprep.subr.mxu0 0.0
    %337 = vmatpush1.msra.mxu0 0.0
    %338 = vmatprep.subr.mxu0 0.0
    %339 = vmatpush1.msra.mxu0 0.0
    %340 = vmatprep.subr.mxu0 0.0
    %341 = vmatpush1.msra.mxu0 0.0
    %342 = vmatprep.subr.mxu0 0.0
    %343 = vmatpush1.msra.mxu0 0.0
    %344 = vmatprep.subr.mxu0 0.0
    %345 = vmatpush1.msra.mxu0 0.0
    %346 = vmatprep.subr.mxu0 0.0
    %347 = vmatpush1.msra.mxu0 0.0
    %348 = vmatprep.subr.mxu0 0.0
    %349 = vmatpush1.msra.mxu0 0.0
    %350 = vmatprep.mubr.f32.mxu0 0.0
    %351 = vmatmul.mubr.f32.gmra.mrb[0].mxu0 %v262
    %v352 = vpop.f32.mrb[0].mxu0
    %v353 = vadd.f32 %v228, %v352
    %v354 = vpop.f32.mrb[0].mxu0
    %355 = vmatprep.mubr.f32.mxu0 0.0
    %356 = vmatmul.mubr.f32.gmra.mrb[0].mxu0 %v265
    %v357 = vpop.f32.mrb[0].mxu0
    %v358 = vadd.f32 %v233, %v357
    %v359 = vpop.f32.mrb[0].mxu0
    %360 = vmatprep.mubr.f32.mxu0 0.0
    %361 = vmatmul.mubr.f32.gmra.mrb[0].mxu0 %v268
    %v362 = vpop.f32.mrb[0].mxu0
    %v363 = vadd.f32 %v238, %v362
    %v364 = vpop.f32.mrb[0].mxu0
    %365 = vmatprep.mubr.f32.mxu0 0.0
    %366 = vmatmul.mubr.f32.gmra.mrb[0].mxu0 %v271
    %v367 = vpop.f32.mrb[0].mxu0
    %v368 = vadd.f32 %v243, %v367
    %v369 = vpop.f32.mrb[0].mxu0
    %370 = vmatprep.mubr.f32.mxu0 0.0
    %371 = vmatmul.mubr.f32.gmra.mrb[0].mxu0 %v274
    %v372 = vpop.f32.mrb[0].mxu0
    %v373 = vadd.f32 %v248, %v372
    %v374 = vpop.f32.mrb[0].mxu0
    %375 = vmatprep.mubr.f32.mxu0 0.0
    %376 = vmatmul.mubr.f32.gmra.mrb[0].mxu0 %v277
    %v377 = vpop.f32.mrb[0].mxu0
    %v378 = vadd.f32 %v253, %v377
    %v379 = vpop.f32.mrb[0].mxu0
    %380 = vmatprep.mubr.f32.mxu0 0.0
    %381 = vmatmul.mubr.f32.gmra.mrb[0].mxu0 %v280
    %v382 = vpop.f32.mrb[0].mxu0
    %v383 = vadd.f32 %v258, %v382
    %v384 = vpop.f32.mrb[0].mxu0
    %385 = vdwg.mxu0
    %v386 = vtanh.pop %v353
    %v387 = vtanh.pop %v358
    %v388 = vtanh.pop %v363
    %v389 = vtanh.pop %v368
    %v390 = vtanh.pop %v373
    %v391 = vtanh.pop %v378
    %v392 = vtanh.pop %v383
    %393 = vset.pattern.permute.xlu0 1
    %394 = vperm.xlu0 %393, %v148
    %v395 = vpop.permute.xlu0 %394
    %397 = vset.pattern.permute.xlu0 1
    %398 = vperm.xlu0 %397, %v149
    %v399 = vpop.permute.xlu0 %398
    %401 = vset.pattern.permute.xlu0 1
    %402 = vperm.xlu0 %401, %v150
    %v403 = vpop.permute.xlu0 %402
    %405 = vset.pattern.permute.xlu0 1
    %406 = vperm.xlu0 %405, %v151
    %v407 = vpop.permute.xlu0 %406
    %409 = vset.pattern.permute.xlu0 1
    %410 = vperm.xlu0 %409, %v152
    %v411 = vpop.permute.xlu0 %410
    %413 = vset.pattern.permute.xlu0 1
    %414 = vperm.xlu0 %413, %v153
    %v415 = vpop.permute.xlu0 %414
    %417 = vset.pattern.permute.xlu0 1
    %418 = vperm.xlu0 %417, %v154
    %v419 = vpop.permute.xlu0 %418
    %v421 = vmul.f32 %v395, %v353
    %v422 = vmul.f32 %v399, %v358
    %v423 = vmul.f32 %v403, %v363
    %v424 = vmul.f32 %v407, %v368
    %v425 = vmul.f32 %v411, %v373
    %v426 = vmul.f32 %v415, %v378
    %v427 = vmul.f32 %v419, %v383
    %v428 = vmul.f32 %v421, %v386
    %v429 = vmul.f32 %v422, %v387
    %v430 = vmul.f32 %v423, %v388
    %v431 = vmul.f32 %v424, %v389
    %v432 = vmul.f32 %v425, %v390
    %v433 = vmul.f32 %v426, %v391
    %v434 = vmul.f32 %v427, %v392
    %v435 = vadd.f32 %v386, %v428
    %v436 = vadd.f32 %v387, %v429
    %v437 = vadd.f32 %v388, %v430
    %v438 = vadd.f32 %v389, %v431
    %v439 = vadd.f32 %v390, %v432
    %v440 = vadd.f32 %v391, %v433
    %v441 = vadd.f32 %v392, %v434
    %v442 = vld [vmem:[%s6] sm:$0xff]
    %v443 = vld [vmem:[%s6 + $0x8] sm:$0xff]
    %v444 = vld [vmem:[%s6 + $0x10] sm:$0xff]
    %v445 = vld [vmem:[%s6 + $0x18] sm:$0xff]
    %v446 = vld [vmem:[%s6 + $0x20] sm:$0xff]
    %v447 = vld [vmem:[%s6 + $0x28] sm:$0xff]
    %v448 = vld [vmem:[%s6 + $0x30] sm:$0x3]
    %v449 = vld [vmem:[%s7] sm:$0xff]
    %v450 = vld [vmem:[%s7 + $0x8] sm:$0xff]
    %v451 = vld [vmem:[%s7 + $0x10] sm:$0xff]
    %v452 = vld [vmem:[%s7 + $0x18] sm:$0xff]
    %v453 = vld [vmem:[%s7 + $0x20] sm:$0xff]
    %v454 = vld [vmem:[%s7 + $0x28] sm:$0xff]
    %v455 = vld [vmem:[%s7 + $0x30] sm:$0x3]
    %457 = vset.pattern.permute.xlu0 0
    %458 = vperm.xlu0 %457, %v449
    %v459 = vpop.permute.xlu0 %458
    %462 = vset.pattern.permute.xlu0 0
    %463 = vperm.xlu0 %462, %v450
    %v464 = vpop.permute.xlu0 %463
    %467 = vset.pattern.permute.xlu0 0
    %468 = vperm.xlu0 %467, %v451
    %v469 = vpop.permute.xlu0 %468
    %472 = vset.pattern.permute.xlu0 0
    %473 = vperm.xlu0 %472, %v452
    %v474 = vpop.permute.xlu0 %473
    %477 = vset.pattern.permute.xlu0 0
    %478 = vperm.xlu0 %477, %v453
    %v479 = vpop.permute.xlu0 %478
    %482 = vset.pattern.permute.xlu0 0
    %483 = vperm.xlu0 %482, %v454
    %v484 = vpop.permute.xlu0 %483
    %487 = vset.pattern.permute.xlu0 0
    %488 = vperm.xlu0 %487, %v455
    %v489 = vpop.permute.xlu0 %488
    %v492 = vsel %vm260, %v442, 0
    %v495 = vsel %vm260, %v443, 0
    %v498 = vsel %vm260, %v444, 0
    %v501 = vsel %vm260, %v445, 0
    %v504 = vsel %vm260, %v446, 0
    %v507 = vsel %vm260, %v447, 0
    %v510 = vsel %vm260, %v448, 0
    %v513 = vsel %vm282, %v441, 0
    %515 = vmatprep.subr.mxu0 0.0
    %516 = vmatpush1.msra.mxu0 %v435
    %517 = vmatprep.subr.mxu0 0.0
    %518 = vmatpush1.msra.mxu0 %v436
    %519 = vmatprep.subr.mxu0 0.0
    %520 = vmatpush1.msra.mxu0 %v437
    %521 = vmatprep.subr.mxu0 0.0
    %522 = vmatpush1.msra.mxu0 %v438
    %523 = vmatprep.subr.mxu0 0.0
    %524 = vmatpush1.msra.mxu0 %v439
    %525 = vmatprep.subr.mxu0 0.0
    %526 = vmatpush1.msra.mxu0 %v440
    %527 = vmatprep.subr.mxu0 0.0
    %528 = vmatpush1.msra.mxu0 %v513
    %529 = vmatprep.subr.mxu0 0.0
    %530 = vmatpush1.msra.mxu0 0.0
    %531 = vmatprep.subr.mxu0 0.0
    %532 = vmatpush1.msra.mxu0 0.0
    %533 = vmatprep.subr.mxu0 0.0
    %534 = vmatpush1.msra.mxu0 0.0
    %535 = vmatprep.subr.mxu0 0.0
    %536 = vmatpush1.msra.mxu0 0.0
    %537 = vmatprep.subr.mxu0 0.0
    %538 = vmatpush1.msra.mxu0 0.0
    %539 = vmatprep.subr.mxu0 0.0
    %540 = vmatpush1.msra.mxu0 0.0
    %541 = vmatprep.subr.mxu0 0.0
    %542 = vmatpush1.msra.mxu0 0.0
    %543 = vmatprep.subr.mxu0 0.0
    %544 = vmatpush1.msra.mxu0 0.0
    %545 = vmatprep.subr.mxu0 0.0
    %546 = vmatpush1.msra.mxu0 0.0
    %547 = vmatprep.subr.mxu0 0.0
    %548 = vmatpush1.msra.mxu0 0.0
    %549 = vmatprep.subr.mxu0 0.0
    %550 = vmatpush1.msra.mxu0 0.0
    %551 = vmatprep.subr.mxu0 0.0
    %552 = vmatpush1.msra.mxu0 0.0
    %553 = vmatprep.subr.mxu0 0.0
    %554 = vmatpush1.msra.mxu0 0.0
    %555 = vmatprep.subr.mxu0 0.0
    %556 = vmatpush1.msra.mxu0 0.0
    %557 = vmatprep.subr.mxu0 0.0
    %558 = vmatpush1.msra.mxu0 0.0
    %559 = vmatprep.subr.mxu0 0.0
    %560 = vmatpush1.msra.mxu0 0.0
    %561 = vmatprep.subr.mxu0 0.0
    %562 = vmatpush1.msra.mxu0 0.0
    %563 = vmatprep.subr.mxu0 0.0
    %564 = vmatpush1.msra.mxu0 0.0
    %565 = vmatprep.subr.mxu0 0.0
    %566 = vmatpush1.msra.mxu0 0.0
    %567 = vmatprep.subr.mxu0 0.0
    %568 = vmatpush1.msra.mxu0 0.0
    %569 = vmatprep.subr.mxu0 0.0
    %570 = vmatpush1.msra.mxu0 0.0
    %571 = vmatprep.subr.mxu0 0.0
    %572 = vmatpush1.msra.mxu0 0.0
    %573 = vmatprep.subr.mxu0 0.0
    %574 = vmatpush1.msra.mxu0 0.0
    %575 = vmatprep.subr.mxu0 0.0
    %576 = vmatpush1.msra.mxu0 0.0
    %577 = vmatprep.subr.mxu0 0.0
    %578 = vmatpush1.msra.mxu0 0.0
    %579 = vmatprep.mubr.f32.mxu0 0.0
    %580 = vmatmul.mubr.f32.gmra.mrb[0].mxu0 %v492
    %v581 = vpop.f32.mrb[0].mxu0
    %v582 = vadd.f32 %v459, %v581
    %v583 = vpop.f32.mrb[0].mxu0
    %584 = vmatprep.mubr.f32.mxu0 0.0
    %585 = vmatmul.mubr.f32.gmra.mrb[0].mxu0 %v495
    %v586 = vpop.f32.mrb[0].mxu0
    %v587 = vadd.f32 %v464, %v586
    %v588 = vpop.f32.mrb[0].mxu0
    %589 = vmatprep.mubr.f32.mxu0 0.0
    %590 = vmatmul.mubr.f32.gmra.mrb[0].mxu0 %v498
    %v591 = vpop.f32.mrb[0].mxu0
    %v592 = vadd.f32 %v469, %v591
    %v593 = vpop.f32.mrb[0].mxu0
    %594 = vmatprep.mubr.f32.mxu0 0.0
    %595 = vmatmul.mubr.f32.gmra.mrb[0].mxu0 %v501
    %v596 = vpop.f32.mrb[0].mxu0
    %v597 = vadd.f32 %v474, %v596
    %v598 = vpop.f32.mrb[0].mxu0
    %599 = vmatprep.mubr.f32.mxu0 0.0
    %600 = vmatmul.mubr.f32.gmra.mrb[0].mxu0 %v504
    %v601 = vpop.f32.mrb[0].mxu0
    %v602 = vadd.f32 %v479, %v601
    %v603 = vpop.f32.mrb[0].mxu0
    %604 = vmatprep.mubr.f32.mxu0 0.0
    %605 = vmatmul.mubr.f32.gmra.mrb[0].mxu0 %v507
    %v606 = vpop.f32.mrb[0].mxu0
    %v607 = vadd.f32 %v484, %v606
    %v608 = vpop.f32.mrb[0].mxu0
    %609 = vmatprep.mubr.f32.mxu0 0.0
    %610 = vmatmul.mubr.f32.gmra.mrb[0].mxu0 %v510
    %v611 = vpop.f32.mrb[0].mxu0
    %v612 = vadd.f32 %v489, %v611
    %v613 = vpop.f32.mrb[0].mxu0
    %614 = vdwg.mxu0
    %v615 = vtanh.pop %v582
    %v616 = vtanh.pop %v587
    %v617 = vtanh.pop %v592
    %v618 = vtanh.pop %v597
    %v619 = vtanh.pop %v602
    %v620 = vtanh.pop %v607
    %v621 = vtanh.pop %v612
    %622 = vset.pattern.permute.xlu0 2
    %623 = vperm.xlu0 %622, %v148
    %v624 = vpop.permute.xlu0 %623
    %626 = vset.pattern.permute.xlu0 2
    %627 = vperm.xlu0 %626, %v149
    %v628 = vpop.permute.xlu0 %627
    %630 = vset.pattern.permute.xlu0 2
    %631 = vperm.xlu0 %630, %v150
    %v632 = vpop.permute.xlu0 %631
    %634 = vset.pattern.permute.xlu0 2
    %635 = vperm.xlu0 %634, %v151
    %v636 = vpop.permute.xlu0 %635
    %638 = vset.pattern.permute.xlu0 2
    %639 = vperm.xlu0 %638, %v152
    %v640 = vpop.permute.xlu0 %639
    %642 = vset.pattern.permute.xlu0 2
    %643 = vperm.xlu0 %642, %v153
    %v644 = vpop.permute.xlu0 %643
    %646 = vset.pattern.permute.xlu0 2
    %647 = vperm.xlu0 %646, %v154
    %v648 = vpop.permute.xlu0 %647
    %v650 = vmul.f32 %v624, %v582
    %v651 = vmul.f32 %v628, %v587
    %v652 = vmul.f32 %v632, %v592
    %v653 = vmul.f32 %v636, %v597
    %v654 = vmul.f32 %v640, %v602
    %v655 = vmul.f32 %v644, %v607
    %v656 = vmul.f32 %v648, %v612
    %v657 = vmul.f32 %v650, %v615
    %v658 = vmul.f32 %v651, %v616
    %v659 = vmul.f32 %v652, %v617
    %v660 = vmul.f32 %v653, %v618
    %v661 = vmul.f32 %v654, %v619
    %v662 = vmul.f32 %v655, %v620
    %v663 = vmul.f32 %v656, %v621
    %v664 = vadd.f32 %v615, %v657
    %v665 = vadd.f32 %v616, %v658
    %v666 = vadd.f32 %v617, %v659
    %v667 = vadd.f32 %v618, %v660
    %v668 = vadd.f32 %v619, %v661
    %v669 = vadd.f32 %v620, %v662
    %v670 = vadd.f32 %v621, %v663
    %v671 = vld [vmem:[%s8] sm:$0x3]
    %v672 = vld [vmem:[%s9] sm:$0x3]
    %674 = vset.pattern.permute.xlu0 0
    %675 = vperm.xlu0 %674, %v672
    %v676 = vpop.permute.xlu0 %675
    %v679 = vsel %vm260, %v671, 0
    %v682 = vsel %vm282, %v670, 0
    %684 = vmatprep.subr.mxu0 0.0
    %685 = vmatpush1.msra.mxu0 %v664
    %686 = vmatprep.subr.mxu0 0.0
    %687 = vmatpush1.msra.mxu0 %v665
    %688 = vmatprep.subr.mxu0 0.0
    %689 = vmatpush1.msra.mxu0 %v666
    %690 = vmatprep.subr.mxu0 0.0
    %691 = vmatpush1.msra.mxu0 %v667
    %692 = vmatprep.subr.mxu0 0.0
    %693 = vmatpush1.msra.mxu0 %v668
    %694 = vmatprep.subr.mxu0 0.0
    %695 = vmatpush1.msra.mxu0 %v669
    %696 = vmatprep.subr.mxu0 0.0
    %697 = vmatpush1.msra.mxu0 %v682
    %698 = vmatprep.subr.mxu0 0.0
    %699 = vmatpush1.msra.mxu0 0.0
    %700 = vmatprep.subr.mxu0 0.0
    %701 = vmatpush1.msra.mxu0 0.0
    %702 = vmatprep.subr.mxu0 0.0
    %703 = vmatpush1.msra.mxu0 0.0
    %704 = vmatprep.subr.mxu0 0.0
    %705 = vmatpush1.msra.mxu0 0.0
    %706 = vmatprep.subr.mxu0 0.0
    %707 = vmatpush1.msra.mxu0 0.0
    %708 = vmatprep.subr.mxu0 0.0
    %709 = vmatpush1.msra.mxu0 0.0
    %710 = vmatprep.subr.mxu0 0.0
    %711 = vmatpush1.msra.mxu0 0.0
    %712 = vmatprep.subr.mxu0 0.0
    %713 = vmatpush1.msra.mxu0 0.0
    %714 = vmatprep.subr.mxu0 0.0
    %715 = vmatpush1.msra.mxu0 0.0
    %716 = vmatprep.subr.mxu0 0.0
    %717 = vmatpush1.msra.mxu0 0.0
    %718 = vmatprep.subr.mxu0 0.0
    %719 = vmatpush1.msra.mxu0 0.0
    %720 = vmatprep.subr.mxu0 0.0
    %721 = vmatpush1.msra.mxu0 0.0
    %722 = vmatprep.subr.mxu0 0.0
    %723 = vmatpush1.msra.mxu0 0.0
    %724 = vmatprep.subr.mxu0 0.0
    %725 = vmatpush1.msra.mxu0 0.0
    %726 = vmatprep.subr.mxu0 0.0
    %727 = vmatpush1.msra.mxu0 0.0
    %728 = vmatprep.subr.mxu0 0.0
    %729 = vmatpush1.msra.mxu0 0.0
    %730 = vmatprep.subr.mxu0 0.0
    %731 = vmatpush1.msra.mxu0 0.0
    %732 = vmatprep.subr.mxu0 0.0
    %733 = vmatpush1.msra.mxu0 0.0
    %734 = vmatprep.subr.mxu0 0.0
    %735 = vmatpush1.msra.mxu0 0.0
    %736 = vmatprep.subr.mxu0 0.0
    %737 = vmatpush1.msra.mxu0 0.0
    %738 = vmatprep.subr.mxu0 0.0
    %739 = vmatpush1.msra.mxu0 0.0
    %740 = vmatprep.subr.mxu0 0.0
    %741 = vmatpush1.msra.mxu0 0.0
    %742 = vmatprep.subr.mxu0 0.0
    %743 = vmatpush1.msra.mxu0 0.0
    %744 = vmatprep.subr.mxu0 0.0
    %745 = vmatpush1.msra.mxu0 0.0
    %746 = vmatprep.subr.mxu0 0.0
    %747 = vmatpush1.msra.mxu0 0.0
    %748 = vmatprep.mubr.f32.mxu0 0.0
    %749 = vmatmul.mubr.f32.gmra.mrb[0].mxu0 %v679
    %v750 = vpop.f32.mrb[0].mxu0
    %v751 = vadd.f32 %v676, %v750
    %v752 = vpop.f32.mrb[0].mxu0
    %753 = vdwg.mxu0
    %754 = vst [vmem:[#allocation2] sm:$0x3] %v751
    // Predicated region
    $region42: #{tpu_custom_call.1} parent=1 // pred_check
      _
    $region43: #{tpu_custom_call.1} parent=1 // pred_check_branch
      %756 = sbr.rel (0) target = $region45
    $region44: #{tpu_custom_call.1} parent=1 // pred_region
      %s758 = ssub.s32 32, 32
      %759 = vsyncadd [#allocation3], %s758
      %s761 = sshll.u32 [#allocation2], 4
      %s762 = int_to_ptr.vmem [resolvable:$true] %s761
      %764 = dma.vmem_to_hbm [thread:$0]  %s762, 32, %s10, [#allocation3]
    $region45: #{tpu_custom_call.1} parent=1 // pred_fallthru
      _
    // Predicated region
    $region46: #{tpu_custom_call.1} parent=1 // pred_check
      _
    $region47: #{tpu_custom_call.1} parent=1 // pred_check_branch
      %766 = sbr.rel (0) target = $region49
    $region48: #{tpu_custom_call.1} parent=1 // pred_region
      %767 = dma.done [#allocation3], 32
    $region49: #{tpu_custom_call.1} parent=1 // pred_fallthru
      _
    %768 = vsyncpa [#allocation3], 1

</llo_original>
